<compile_context>
chip_gen: v5e
topology: v5e:2x2
jax: 0.10.0
libtpu: 0.0.40
codegen_flags: <defaults>
</compile_context>

<pallas_src>
import functools
import math

import numpy as np
import jax
import jax.numpy as jnp
from jax import lax
from jax.experimental import pallas as pl
from jax.experimental.pallas import tpu as pltpu


_VMEM_LIMIT = 64 * 1024 * 1024   # explicit scoped-VMEM limit (> v5e/v6e defaults, <= v7x physical)


# ----------------------------------------------------------------------------------
# Small helpers
# ----------------------------------------------------------------------------------

def _round_up(n, m):
    return ((n + m - 1) // m) * m


def _pick_tile(dim, target, align):
    """Largest tile <= target that is a multiple of `align` and divides `dim`; else full dim."""
    if dim <= target:
        return dim
    t = (target // align) * align
    while t >= align:
        if dim % t == 0:
            return t
        t -= align
    return dim


def _head_group_size(heads, dh):
    """Heads processed per attention grid step so the group lane width g*dh is a
    multiple of 128 (lane-dense slices/stores); fall back to all heads for tiny models."""
    if dh % 128 == 0:
        g = 1
    else:
        g = 128 // math.gcd(dh, 128)          # smallest g with (g*dh) % 128 == 0
    if g > heads or heads % g != 0:
        g = heads
    return g


def _qkv_layout(D, heads, g):
    """Column permutation grouping the fused QKV output as
       [grp0: Q(g*dh) K(g*dh) V(g*dh) | grp1: ...] so per-group BlockSpec slices are
       contiguous and lane-aligned."""
    dh = D // heads
    perm = []
    for grp in range(heads // g):
        for which in range(3):                 # Q, K, V
            for h in range(g):
                c0 = which * D + (grp * g + h) * dh
                perm.extend(range(c0, c0 + dh))
    return np.asarray(perm, dtype=np.int32)


# ----------------------------------------------------------------------------------
# Tiled linear  (out = x @ w + b [+ residual]),  bf16 operands / f32 accumulation
# ----------------------------------------------------------------------------------

def _matmul_kernel(*refs, has_residual):
    if has_residual:
        x_ref, w_ref, b_ref, r_ref, o_ref, acc_ref = refs
    else:
        x_ref, w_ref, b_ref, o_ref, acc_ref = refs
        r_ref = None
    kk = pl.program_id(2)

    @pl.when(kk == 0)
    def _():
        acc_ref[...] = jnp.zeros_like(acc_ref)

    acc_ref[...] += jnp.dot(x_ref[...], w_ref[...],
                            preferred_element_type=jnp.float32)

    @pl.when(kk == pl.num_programs(2) - 1)
    def _():
        out = acc_ref[...] + b_ref[...]
        if has_residual:
            out = out + r_ref[...].astype(jnp.float32)
        o_ref[...] = out.astype(o_ref.dtype)


def pallas_linear(x, w, b, residual=None, *, out_dtype=jnp.bfloat16,
                  tm_target=256, tn_target=512, tk_target=512):
    M, K = x.shape
    K2, N = w.shape
    assert K == K2
    if M % 128 == 0:
        tm, Mp = _pick_tile(M, tm_target, 128), M
    else:                                   # awkward row count: pad instead of degenerate tiles
        tm = min(tm_target, _round_up(M, 8))
        Mp = _round_up(M, tm)
    tn = _pick_tile(N, tn_target, 128)
    tk = _pick_tile(K, tk_target, 128)
    nm, nn, nk = Mp // tm, N // tn, K // tk

    xb = x.astype(jnp.bfloat16)
    if Mp != M:
        xb = jnp.pad(xb, ((0, Mp - M), (0, 0)))
    wb = w.astype(jnp.bfloat16)
    b2 = b.reshape(1, N).astype(jnp.float32)

    in_specs = [
        pl.BlockSpec((tm, tk), lambda i, j, k: (i, k)),
        pl.BlockSpec((tk, tn), lambda i, j, k: (k, j)),
        pl.BlockSpec((1, tn), lambda i, j, k: (0, j)),
    ]
    args = [xb, wb, b2]
    if residual is not None:
        rb = residual.astype(jnp.bfloat16)
        if Mp != M:
            rb = jnp.pad(rb, ((0, Mp - M), (0, 0)))
        in_specs.append(pl.BlockSpec((tm, tn), lambda i, j, k: (i, j)))
        args.append(rb)

    out = pl.pallas_call(
        functools.partial(_matmul_kernel, has_residual=residual is not None),
        grid=(nm, nn, nk),
        out_shape=jax.ShapeDtypeStruct((Mp, N), out_dtype),
        in_specs=in_specs,
        out_specs=pl.BlockSpec((tm, tn), lambda i, j, k: (i, j)),
        scratch_shapes=[pltpu.VMEM((tm, tn), jnp.float32)],
        compiler_params=pltpu.CompilerParams(
            dimension_semantics=("parallel", "parallel", "arbitrary"),
            vmem_limit_bytes=_VMEM_LIMIT),
        cost_estimate=pl.CostEstimate(flops=2 * Mp * N * K, transcendentals=0,
                                      bytes_accessed=2 * (Mp * K + K * N + Mp * N)),
    )(*args)
    return out[:M] if Mp != M else out


# ----------------------------------------------------------------------------------
# Fused (x + positional_embedding) -> ln_pre,  row-tiled over (batch, seq tiles)
# ----------------------------------------------------------------------------------

def _addpos_ln_kernel(x_ref, pos_ref, g_ref, b_ref, o_ref, *, inv_d):
    x = x_ref[0].astype(jnp.float32) + pos_ref[...]
    mean = jnp.sum(x, axis=-1, keepdims=True) * inv_d
    xc = x - mean
    var = jnp.sum(xc * xc, axis=-1, keepdims=True) * inv_d
    y = xc * lax.rsqrt(var + 1e-5)
    o_ref[0] = (y * g_ref[...] + b_ref[...]).astype(o_ref.dtype)


def pallas_addpos_layernorm(x, pos, gamma, beta):
    B, S, D = x.shape            # S already padded to a multiple of 128
    ts = _pick_tile(S, 256, 128)
    return pl.pallas_call(
        functools.partial(_addpos_ln_kernel, inv_d=1.0 / D),
        grid=(B, S // ts),
        out_shape=jax.ShapeDtypeStruct((B, S, D), jnp.bfloat16),
        in_specs=[pl.BlockSpec((1, ts, D), lambda b, i: (b, i, 0)),
                  pl.BlockSpec((ts, D), lambda b, i: (i, 0)),
                  pl.BlockSpec((1, D), lambda b, i: (0, 0)),
                  pl.BlockSpec((1, D), lambda b, i: (0, 0))],
        out_specs=pl.BlockSpec((1, ts, D), lambda b, i: (b, i, 0)),
        compiler_params=pltpu.CompilerParams(
            dimension_semantics=("parallel", "parallel"),
            vmem_limit_bytes=_VMEM_LIMIT),
    )(x, pos.astype(jnp.float32),
      gamma.reshape(1, D).astype(jnp.float32), beta.reshape(1, D).astype(jnp.float32))


# ----------------------------------------------------------------------------------
# Fused LayerNorm -> linear  (ln_1 + QKV projection), row- and output-column tiled
# ----------------------------------------------------------------------------------

def _ln_linear_kernel(x_ref, g_ref, bln_ref, w_ref, b_ref, o_ref, *, inv_d):
    x = x_ref[...].astype(jnp.float32)
    mean = jnp.sum(x, axis=-1, keepdims=True) * inv_d
    xc = x - mean
    var = jnp.sum(xc * xc, axis=-1, keepdims=True) * inv_d
    h = (xc * lax.rsqrt(var + 1e-5) * g_ref[...] + bln_ref[...]).astype(jnp.bfloat16)
    acc = jnp.dot(h, w_ref[...], preferred_element_type=jnp.float32)
    o_ref[...] = (acc + b_ref[...]).astype(o_ref.dtype)


def pallas_ln_linear(x, gamma, beta, w, b, *, out_dtype=jnp.bfloat16,
                     tm_target=256, tn_target=1536):
    M, D = x.shape
    D2, N = w.shape
    assert D == D2
    tm = _pick_tile(M, tm_target, 128)
    tn = _pick_tile(N, tn_target, 128)   # tile the 3D output dim (keeps v7x VMEM headroom)
    nm, nn = M // tm, N // tn
    return pl.pallas_call(
        functools.partial(_ln_linear_kernel, inv_d=1.0 / D),
        grid=(nm, nn),
        out_shape=jax.ShapeDtypeStruct((M, N), out_dtype),
        in_specs=[pl.BlockSpec((tm, D), lambda i, j: (i, 0)),
                  pl.BlockSpec((1, D), lambda i, j: (0, 0)),
                  pl.BlockSpec((1, D), lambda i, j: (0, 0)),
                  pl.BlockSpec((D, tn), lambda i, j: (0, j)),
                  pl.BlockSpec((1, tn), lambda i, j: (0, j))],
        out_specs=pl.BlockSpec((tm, tn), lambda i, j: (i, j)),
        compiler_params=pltpu.CompilerParams(
            dimension_semantics=("parallel", "parallel"),
            vmem_limit_bytes=_VMEM_LIMIT),
        cost_estimate=pl.CostEstimate(flops=2 * M * D * N + 8 * M * D * nn,
                                      transcendentals=M * nn,
                                      bytes_accessed=2 * (M * D + D * N + M * N)),
    )(x,
      gamma.reshape(1, D).astype(jnp.float32), beta.reshape(1, D).astype(jnp.float32),
      w.astype(jnp.bfloat16), b.reshape(1, N).astype(jnp.float32))


# ----------------------------------------------------------------------------------
# Fused LayerNorm -> Linear -> QuickGELU -> Linear -> +residual  (ln_2 + MLP),
# hidden dimension chunked on an 'arbitrary' grid axis with an f32 VMEM accumulator.
# ----------------------------------------------------------------------------------

def _ln_mlp_kernel(x_ref, g_ref, bln_ref, w1_ref, b1_ref, w2_ref, b2_ref,
                   o_ref, acc_ref, *, inv_d):
    hh = pl.program_id(1)

    @pl.when(hh == 0)
    def _():
        acc_ref[...] = jnp.zeros_like(acc_ref)

    x = x_ref[...].astype(jnp.float32)
    mean = jnp.sum(x, axis=-1, keepdims=True) * inv_d
    xc = x - mean
    var = jnp.sum(xc * xc, axis=-1, keepdims=True) * inv_d
    h = (xc * lax.rsqrt(var + 1e-5) * g_ref[...] + bln_ref[...]).astype(jnp.bfloat16)
    h1 = jnp.dot(h, w1_ref[...], preferred_element_type=jnp.float32) + b1_ref[...]
    h1 = h1 * jax.nn.sigmoid(1.702 * h1)                 # QuickGELU (f32 on VPU/EUP)
    acc_ref[...] += jnp.dot(h1.astype(jnp.bfloat16), w2_ref[...],
                            preferred_element_type=jnp.float32)

    @pl.when(hh == pl.num_programs(1) - 1)
    def _():
        o_ref[...] = (x + acc_ref[...] + b2_ref[...]).astype(o_ref.dtype)  # fused residual


def pallas_ln_mlp(x, gamma, beta, w1, b1, w2, b2, *, tm_target=256, th_target=1024):
    M, D = x.shape
    Hdim = w1.shape[1]
    tm = _pick_tile(M, tm_target, 128)
    th = _pick_tile(Hdim, th_target, 128)
    nm, nh = M // tm, Hdim // th
    return pl.pallas_call(
        functools.partial(_ln_mlp_kernel, inv_d=1.0 / D),
        grid=(nm, nh),
        out_shape=jax.ShapeDtypeStruct((M, D), jnp.bfloat16),
        in_specs=[pl.BlockSpec((tm, D), lambda i, h: (i, 0)),
                  pl.BlockSpec((1, D), lambda i, h: (0, 0)),
                  pl.BlockSpec((1, D), lambda i, h: (0, 0)),
                  pl.BlockSpec((D, th), lambda i, h: (0, h)),
                  pl.BlockSpec((1, th), lambda i, h: (0, h)),
                  pl.BlockSpec((th, D), lambda i, h: (h, 0)),
                  pl.BlockSpec((1, D), lambda i, h: (0, 0))],
        out_specs=pl.BlockSpec((tm, D), lambda i, h: (i, 0)),
        scratch_shapes=[pltpu.VMEM((tm, D), jnp.float32)],
        compiler_params=pltpu.CompilerParams(
            dimension_semantics=("parallel", "arbitrary"),
            vmem_limit_bytes=_VMEM_LIMIT),
        cost_estimate=pl.CostEstimate(flops=4 * M * D * Hdim,
                                      transcendentals=M * Hdim + M * nh,
                                      bytes_accessed=2 * (2 * M * D + 2 * D * Hdim)),
    )(x,
      gamma.reshape(1, D).astype(jnp.float32), beta.reshape(1, D).astype(jnp.float32),
      w1.astype(jnp.bfloat16), b1.reshape(1, Hdim).astype(jnp.float32),
      w2.astype(jnp.bfloat16), b2.reshape(1, D).astype(jnp.float32))


# ----------------------------------------------------------------------------------
# Attention: grid over (batch, head-group).  QKV columns are pre-permuted so each
# group's [Q|K|V] block is a contiguous, lane-aligned slice; padded key columns are
# masked; head-averaged probabilities accumulate in the f32 output ref across groups.
# ----------------------------------------------------------------------------------

def _attn_kernel(qkv_ref, *out_refs, g, dh, s_real, inv_heads, want_probs):
    if want_probs:
        o_ref, p_ref = out_refs
    else:
        (o_ref,) = out_refs
    gd = g * dh
    qkv = qkv_ref[0]                                   # (S_pad, 3*g*dh) bf16
    s_pad = qkv.shape[0]

    kmask = None
    if s_real < s_pad:                                 # static: mask padded key columns
        col = lax.broadcasted_iota(jnp.int32, (s_pad, s_pad), 1)
        kmask = col < s_real

    outs = []
    p_sum = None
    for h in range(g):                                 # small group -> bounded live ranges
        q = qkv[:, h * dh:(h + 1) * dh]                # softmax scale pre-folded into W_q
        k = qkv[:, gd + h * dh: gd + (h + 1) * dh]
        v = qkv[:, 2 * gd + h * dh: 2 * gd + (h + 1) * dh]
        s = lax.dot_general(q, k, (((1,), (1,)), ((), ())),
                            preferred_element_type=jnp.float32)       # (S_pad, S_pad) f32
        if kmask is not None:
            s = jnp.where(kmask, s, -1e30)
        s = s - jnp.max(s, axis=-1, keepdims=True)
        e = jnp.exp(s)
        p = e / jnp.sum(e, axis=-1, keepdims=True)     # exact softmax (maps are exported)
        o = jnp.dot(p.astype(jnp.bfloat16), v, preferred_element_type=jnp.float32)
        outs.append(o.astype(o_ref.dtype))
        if want_probs:
            p_sum = p if p_sum is None else p_sum + p

    o_ref[0] = jnp.concatenate(outs, axis=-1) if g > 1 else outs[0]   # lane-dense store

    if want_probs:
        grp = pl.program_id(1)

        @pl.when(grp == 0)
        def _():
            p_ref[...] = jnp.zeros_like(p_ref)

        p_ref[0] = p_ref[0] + p_sum                    # accumulate head sum in VMEM (f32)

        @pl.when(grp == pl.num_programs(1) - 1)
        def _():
            p_ref[...] = p_ref[...] * inv_heads        # head mean, single HBM writeback


def pallas_attention(qkv3, heads, want_probs, s_real):
    B, S_pad, threeD = qkv3.shape
    D = threeD // 3
    dh = D // heads
    g = _head_group_size(heads, dh)
    n_groups = heads // g
    gd = g * dh

    kern = functools.partial(_attn_kernel, g=g, dh=dh, s_real=s_real,
                             inv_heads=1.0 / heads, want_probs=want_probs)
    o_shape = jax.ShapeDtypeStruct((B, S_pad, D), jnp.bfloat16)
    o_spec = pl.BlockSpec((1, S_pad, gd), lambda b, grp: (b, 0, grp))
    if want_probs:
        out_shape = (o_shape, jax.ShapeDtypeStruct((B, S_pad, S_pad), jnp.float32))
        out_specs = (o_spec, pl.BlockSpec((1, S_pad, S_pad), lambda b, grp: (b, 0, 0)))
    else:
        out_shape = o_shape
        out_specs = o_spec

    res = pl.pallas_call(
        kern,
        grid=(B, n_groups),
        out_shape=out_shape,
        in_specs=[pl.BlockSpec((1, S_pad, 3 * gd), lambda b, grp: (b, 0, grp))],
        out_specs=out_specs,
        compiler_params=pltpu.CompilerParams(
            dimension_semantics=("parallel", "arbitrary" if want_probs else "parallel"),
            vmem_limit_bytes=_VMEM_LIMIT),
        cost_estimate=pl.CostEstimate(
            flops=4 * B * heads * S_pad * S_pad * dh,
            transcendentals=B * heads * S_pad * S_pad,
            bytes_accessed=2 * B * S_pad * 4 * D
                           + (4 * B * S_pad * S_pad if want_probs else 0)),
    )(qkv3)
    if want_probs:
        return res[0], res[1]
    return res, None


# ----------------------------------------------------------------------------------
# Parameters (deterministic synthetic init, shapes match the PyTorch __init__)
# ----------------------------------------------------------------------------------

def init_params(key, *, input_resolution, patch_size, width, layers, heads,
                output_dim, first_stage_layer):
    scale = width ** -0.5
    n_tokens = (input_resolution // patch_size) ** 2 + 1
    keys = iter(jax.random.split(key, 8 + layers * 4))

    def nrm(shape, s):
        return (s * jax.random.normal(next(keys), shape)).astype(jnp.float32)

    params = {
        "conv1_w": nrm((width, 3, patch_size, patch_size), 0.02),
        "class_embedding": nrm((width,), scale),
        "positional_embedding": nrm((n_tokens, width), scale),
        "ln_pre_g": jnp.ones((width,), jnp.float32),
        "ln_pre_b": jnp.zeros((width,), jnp.float32),
        # ln_post / proj exist in __init__ but the PyTorch forward never applies them.
        "ln_post_g": jnp.ones((width,), jnp.float32),
        "ln_post_b": jnp.zeros((width,), jnp.float32),
        "proj": nrm((width, output_dim), scale),
        "layers": [],
    }
    for _ in range(layers):
        params["layers"].append({
            "ln1_g": jnp.ones((width,), jnp.float32),
            "ln1_b": jnp.zeros((width,), jnp.float32),
            "in_proj_w": nrm((width, 3 * width), scale),     # stored as W^T vs PyTorch
            "in_proj_b": jnp.zeros((3 * width,), jnp.float32),
            "out_proj_w": nrm((width, width), scale),
            "out_proj_b": jnp.zeros((width,), jnp.float32),
            "ln2_g": jnp.ones((width,), jnp.float32),
            "ln2_b": jnp.zeros((width,), jnp.float32),
            "fc1_w": nrm((width, 4 * width), scale),
            "fc1_b": jnp.zeros((4 * width,), jnp.float32),
            "fc2_w": nrm((4 * width, width), scale),
            "fc2_b": jnp.zeros((width,), jnp.float32),
        })
    return params


# ----------------------------------------------------------------------------------
# Forward
# ----------------------------------------------------------------------------------

def visual_transformer_forward(params, cfg, x, mask_ratio=0.0):
    """x: (B, 3, H, W) float32, NCHW (PyTorch conv layout)."""
    B, C, H, W = x.shape
    p = cfg["patch_size"]
    D = cfg["width"]
    heads = cfg["heads"]
    first_stage_layer = cfg["first_stage_layer"]
    dh = D // heads
    hp, wp = H // p, W // p
    n_patch = hp * wp
    S = n_patch + 1
    S_pad = _round_up(S, 128)           # lane-dense tiles; pad keys masked in attention
    g = _head_group_size(heads, dh)
    qkv_perm = _qkv_layout(D, heads, g)

    # ---- conv1 (stride-p patch conv) as a tiled Pallas matmul ----
    # TODO(synk): fold the space-to-depth reshape/transpose into the matmul index_map
    #             (pl.Element gather) to avoid the extra HBM round trip.
    patches = x.reshape(B, C, hp, p, wp, p).transpose(0, 2, 4, 1, 3, 5)
    patches = patches.reshape(B * n_patch, C * p * p)
    w_conv = params["conv1_w"].reshape(D, C * p * p).T            # (C*p*p, D)
    feat = pallas_linear(patches, w_conv, jnp.zeros((D,), jnp.float32))
    feat = feat.reshape(B, n_patch, D)                            # bf16

    # ---- class token + pad to S_pad, then fused (x + pos) -> ln_pre ----
    cls = jnp.broadcast_to(params["class_embedding"].astype(jnp.bfloat16).reshape(1, 1, D),
                           (B, 1, D))
    pad = jnp.zeros((B, S_pad - S, D), jnp.bfloat16)
    xseq = jnp.concatenate([cls, feat, pad], axis=1)              # (B, S_pad, D) bf16

    # get_pos_embed (eval path): stored grid matches the input resolution.
    # TODO(synk): bicubic interpolation branch of get_pos_embed not implemented.
    pos = jnp.pad(params["positional_embedding"], ((0, S_pad - S), (0, 0)))
    xseq = pallas_addpos_layernorm(xseq, pos, params["ln_pre_g"], params["ln_pre_b"])

    # TODO(synk): random_masking (mask_ratio > 0) path not implemented — helper not
    #             defined in the provided module source.
    mae_mask, mae_ids_restore = None, None

    # Residual stream kept batch-first in bf16 (B*S_pad, D): attention is per
    # (batch, head) and LN/MLP are per-row, so this is numerically identical to
    # PyTorch's permute(1,0,2) while removing every inter-kernel transpose.
    x2d = xseq.reshape(B * S_pad, D)

    qscale = dh ** -0.5
    col_scale = jnp.concatenate([jnp.full((D,), qscale, jnp.float32),
                                 jnp.ones((2 * D,), jnp.float32)])

    # TODO(synk): SegViT internals are external to this module; approximated here as a
    # CLIP-style stack of residual attention blocks, collecting head-averaged attention
    # maps from layers >= first_stage_layer into mid_states['attns'].
    attns, hidden_states = [], []
    for li, blk in enumerate(params["layers"]):
        want_probs = li >= first_stage_layer

        # Softmax scale folded into the Q columns (exact, trace-time); columns permuted
        # into head groups so the attention kernel gets contiguous lane-aligned slices.
        w_qkv = (blk["in_proj_w"] * col_scale[None, :])[:, qkv_perm]
        b_qkv = (blk["in_proj_b"] * col_scale)[qkv_perm]

        # ln_1 fused into the QKV projection (bf16 activations out)
        qkv = pallas_ln_linear(x2d, blk["ln1_g"], blk["ln1_b"], w_qkv, b_qkv)

        ao, ap = pallas_attention(qkv.reshape(B, S_pad, 3 * D), heads, want_probs, S)

        # out_proj with the residual add fused into the matmul epilogue
        x2d = pallas_linear(ao.reshape(B * S_pad, D), blk["out_proj_w"],
                            blk["out_proj_b"], residual=x2d)

        # ln_2 + MLP + residual fused, hidden dim chunked on an 'arbitrary' grid axis
        x2d = pallas_ln_mlp(x2d, blk["ln2_g"], blk["ln2_b"],
                            blk["fc1_w"], blk["fc1_b"], blk["fc2_w"], blk["fc2_b"])

        if want_probs:
            attns.append(ap[:, :S, :S])                           # (B, S, S) head mean
            hidden_states.append(x2d.reshape(B, S_pad, D)[:, :S, :].astype(jnp.float32))

    mid_states = {"attns": attns, "hidden_states": hidden_states}
    x_out = x2d.reshape(B, S_pad, D)[:, :S, :].astype(jnp.float32)

    if len(mid_states["attns"]) == 0:
        assert mask_ratio > 0.0, "Must pass the semantic layer~"
    return x_out, mae_mask, mae_ids_restore, mid_states


# ----------------------------------------------------------------------------------
# Main
# ----------------------------------------------------------------------------------

if __name__ == "__main__":
    cfg = dict(input_resolution=16, patch_size=4, width=32, layers=2, heads=4,
               output_dim=32, first_stage_layer=1)

    key = jax.random.PRNGKey(0)
    pkey, xkey = jax.random.split(key)
    params = init_params(pkey, **cfg)

    x = jax.random.normal(xkey, (2, 3, cfg["input_resolution"], cfg["input_resolution"]),
                          dtype=jnp.float32)

    out, mae_mask, mae_ids_restore, mid_states = visual_transformer_forward(
        params, cfg, x, mask_ratio=0.0)

    out = jax.block_until_ready(out)
    for a in mid_states["attns"]:
        jax.block_until_ready(a)

    n_tokens = (cfg["input_resolution"] // cfg["patch_size"]) ** 2 + 1
    assert out.shape == (2, n_tokens, cfg["width"])
    assert mid_states["attns"][0].shape == (2, n_tokens, n_tokens)
    assert bool(jnp.all(jnp.isfinite(out)))
    print("KERNEL_OK")
</pallas_src>

<mosaic_0001>
module attributes {stable_mosaic.version = 11 : i64} {
  func.func @_matmul_kernel(%arg0: i32, %arg1: i32, %arg2: i32, %arg3: memref<32x48xbf16, #tpu.memory_space<vmem>>, %arg4: memref<48x32xbf16, #tpu.memory_space<vmem>>, %arg5: memref<1x32xf32, #tpu.memory_space<vmem>>, %arg6: memref<32x32xbf16, #tpu.memory_space<vmem>>, %arg7: memref<32x32xf32, #tpu.memory_space<vmem>>) attributes {dimension_semantics = [#tpu.dimension_semantics<parallel>, #tpu.dimension_semantics<parallel>, #tpu.dimension_semantics<arbitrary>], iteration_bounds = array<i64: 1, 1, 1>, scalar_prefetch = 0 : i64, scratch_operands = 1 : i64, tpu.core_type = #tpu.core_type<tc>, window_params = [{transform_indices = @transform_0, window_bounds = array<i64: 32, 48>}, {transform_indices = @transform_1, window_bounds = array<i64: 48, 32>}, {transform_indices = @transform_2, window_bounds = array<i64: 1, 32>}, {transform_indices = @transform_3, window_bounds = array<i64: 32, 32>}]} {
    %c0_i32 = arith.constant 0 : i32
    %0 = arith.cmpi eq, %arg2, %c0_i32 : i32
    %1 = arith.extui %0 : i1 to i32
    %c0_i32_0 = arith.constant 0 : i32
    %2 = arith.cmpi ne, %1, %c0_i32_0 : i32
    scf.if %2 {
      %cst_10 = arith.constant 0.000000e+00 : f32
      %12 = vector.broadcast %cst_10 : f32 to vector<32x32xf32>
      %c0_11 = arith.constant 0 : index
      %c0_12 = arith.constant 0 : index
      %13 = vector.load %arg7[%c0_11, %c0_12] : memref<32x32xf32, #tpu.memory_space<vmem>>, vector<32x32xf32>
      tpu.vector_store %arg7[%c0_11, %c0_12], %12 {strides = array<i32>} : memref<32x32xf32, #tpu.memory_space<vmem>>, vector<32x32xf32>,
    } else {
    }
    %c0 = arith.constant 0 : index
    %c0_1 = arith.constant 0 : index
    %3 = vector.load %arg7[%c0, %c0_1] : memref<32x32xf32, #tpu.memory_space<vmem>>, vector<32x32xf32>
    %c0_2 = arith.constant 0 : index
    %c0_3 = arith.constant 0 : index
    %4 = vector.load %arg3[%c0_2, %c0_3] : memref<32x48xbf16, #tpu.memory_space<vmem>>, vector<32x48xbf16>
    %c0_4 = arith.constant 0 : index
    %c0_5 = arith.constant 0 : index
    %5 = vector.load %arg4[%c0_4, %c0_5] : memref<48x32xbf16, #tpu.memory_space<vmem>>, vector<48x32xbf16>
    %cst = arith.constant dense<0.000000e+00> : vector<32x32xf32>
    %6 = tpu.matmul %4, %5, %cst {dimension_numbers = #tpu.dot_dimension_numbers<[1], [0], [0], [1], [0, 0, 1, 1], [], []>} : vector<32x48xbf16>, vector<48x32xbf16>, vector<32x32xf32> -> vector<32x32xf32>
    %7 = arith.addf %3, %6 : vector<32x32xf32>
    %c0_6 = arith.constant 0 : index
    %c0_7 = arith.constant 0 : index
    %8 = vector.load %arg7[%c0_6, %c0_7] : memref<32x32xf32, #tpu.memory_space<vmem>>, vector<32x32xf32>
    tpu.vector_store %arg7[%c0_6, %c0_7], %7 {strides = array<i32>} : memref<32x32xf32, #tpu.memory_space<vmem>>, vector<32x32xf32>,
    %c0_i32_8 = arith.constant 0 : i32
    %9 = arith.cmpi eq, %arg2, %c0_i32_8 : i32
    %10 = arith.extui %9 : i1 to i32
    %c0_i32_9 = arith.constant 0 : i32
    %11 = arith.cmpi ne, %10, %c0_i32_9 : i32
    scf.if %11 {
      %c0_10 = arith.constant 0 : index
      %c0_11 = arith.constant 0 : index
      %12 = vector.load %arg7[%c0_10, %c0_11] : memref<32x32xf32, #tpu.memory_space<vmem>>, vector<32x32xf32>
      %c0_12 = arith.constant 0 : index
      %c0_13 = arith.constant 0 : index
      %13 = vector.load %arg5[%c0_12, %c0_13] : memref<1x32xf32, #tpu.memory_space<vmem>>, vector<1x32xf32>
      %14 = vector.broadcast %13 : vector<1x32xf32> to vector<32x32xf32>
      %15 = arith.addf %12, %14 : vector<32x32xf32>
      %16 = arith.truncf %15 : vector<32x32xf32> to vector<32x32xbf16>
      %c0_14 = arith.constant 0 : index
      %c0_15 = arith.constant 0 : index
      %17 = vector.load %arg6[%c0_14, %c0_15] : memref<32x32xbf16, #tpu.memory_space<vmem>>, vector<32x32xbf16>
      tpu.vector_store %arg6[%c0_14, %c0_15], %16 {strides = array<i32>} : memref<32x32xbf16, #tpu.memory_space<vmem>>, vector<32x32xbf16>,
    } else {
    }
    return
  }
  func.func @transform_0(%arg0: i32, %arg1: i32, %arg2: i32) -> (i32, i32) {
    %c0_i32 = arith.constant 0 : i32
    return %arg0, %arg2 : i32, i32
  }
  func.func @transform_1(%arg0: i32, %arg1: i32, %arg2: i32) -> (i32, i32) {
    %c0_i32 = arith.constant 0 : i32
    return %arg2, %arg1 : i32, i32
  }
  func.func @transform_2(%arg0: i32, %arg1: i32, %arg2: i32) -> (i32, i32) {
    %c0_i32 = arith.constant 0 : i32
    %c0_i32_0 = arith.constant 0 : i32
    return %c0_i32, %arg1 : i32, i32
  }
  func.func @transform_3(%arg0: i32, %arg1: i32, %arg2: i32) -> (i32, i32) {
    %c0_i32 = arith.constant 0 : i32
    return %arg0, %arg1 : i32, i32
  }
}

</mosaic_0001>

<llo_original>
// kernel: tpu_custom_call.1
$region0: #{tpu_custom_call.1}
  #allocation0 [shape = 'u32[]', space=smem, size = 0x4, offset = 0x4, fixed_abs, tag = 'smem constant byte address 0x4 - core index']
  #allocation1 [shape = 'u32[72,128]{1,0:T(1,128)}', space=vmem, size = 0x9000, scoped, tag = 'internal scratch']
  #allocation2 [shape = 'f32[32,32]{1,0:T(8,128)}', space=vmem, size = 0x4000, scoped, tag = 'scratch operand']
  %s0 = inlined_call_operand.vmem [shape: bf16[32,48], index: 0, kind: input, shape index: {}]
  %s1 = inlined_call_operand.vmem [shape: bf16[48,32], index: 1, kind: input, shape index: {}]
  %s2 = inlined_call_operand.vmem [shape: f32[1,32], index: 2, kind: input, shape index: {}]
  %s3 = inlined_call_operand.hbm [shape: bf16[32,32], index: 3, kind: output, shape index: {}]
  %s4 = sld [smem:[#allocation0]]
  $region30: #{tpu_custom_call.1} parent=0
    _
  %s6 = ssub.s32 1, %s4
  %s7 = scalar_select 0, %s6, %s4
  $region1: #{tpu_custom_call.1} parent=0
    #allocation3 [shape = 'u8[8192]{0}', space=vmem, size = 0x2000, scoped, tag = 'output window, operand 0, single buffered']
    #allocation4 [shape = 's32[1]{0}', space=sflag, size = 0x4, scoped, tag = 'scoped memory for tpu_custom_call.1']
    %8 = vsyncpa [#allocation4], 0
    // Predicated region
    $region2: #{tpu_custom_call.1} parent=1 // pred_check
      _
    $region3: #{tpu_custom_call.1} parent=1 // pred_check_branch
      %10 = sbr.rel (0) target = $region5
    $region4: #{tpu_custom_call.1} parent=1 // pred_region
      _
    $region5: #{tpu_custom_call.1} parent=1 // pred_fallthru
      _
    // Predicated region
    $region6: #{tpu_custom_call.1} parent=1 // pred_check
      _
    $region7: #{tpu_custom_call.1} parent=1 // pred_check_branch
      %12 = sbr.rel (0) target = $region9
    $region8: #{tpu_custom_call.1} parent=1 // pred_region
      _
    $region9: #{tpu_custom_call.1} parent=1 // pred_fallthru
      _
    // Predicated region
    $region10: #{tpu_custom_call.1} parent=1 // pred_check
      _
    $region11: #{tpu_custom_call.1} parent=1 // pred_check_branch
      %14 = sbr.rel (0) target = $region13
    $region12: #{tpu_custom_call.1} parent=1 // pred_region
      _
    $region13: #{tpu_custom_call.1} parent=1 // pred_fallthru
      _
    %p16 = scmp.eq.s32.totalorder 0, 0
    // Predicated region
    $region14: #{tpu_custom_call.1} parent=1 // pred_check
      %p17 = pneg %p16
    $region15: #{tpu_custom_call.1} parent=1 // pred_check_branch
      %19 = sbr.rel (%p17) target = $region17
    $region16: #{tpu_custom_call.1} parent=1 // pred_region
      %vm20 = vcmask 261120
      %21 = vst.msk [vmem:[#allocation2] sm:$0xff] %vm20, 0.0
      %22 = vst.msk [vmem:[#allocation2 + $0x8] sm:$0xff] %vm20, 0.0
      %23 = vst.msk [vmem:[#allocation2 + $0x10] sm:$0xff] %vm20, 0.0
      %24 = vst.msk [vmem:[#allocation2 + $0x18] sm:$0xff] %vm20, 0.0
    $region17: #{tpu_custom_call.1} parent=1 // pred_fallthru
      _
    %v25 = vld [vmem:[#allocation2] sm:$0xff]
    %v26 = vld [vmem:[#allocation2 + $0x8] sm:$0xff]
    %v27 = vld [vmem:[#allocation2 + $0x10] sm:$0xff]
    %v28 = vld [vmem:[#allocation2 + $0x18] sm:$0xff]
    %v29 = vld [vmem:[%s0] sm:$0xf]
    %v30 = vld [vmem:[%s0 + $0x4] sm:$0xf]
    %v31 = vld [vmem:[%s0 + $0x8] sm:$0xf]
    %v32 = vld [vmem:[%s0 + $0xc] sm:$0xf]
    %v33 = vld [vmem:[%s1] sm:$0xf]
    %v34 = vld [vmem:[%s1 + $0x4] sm:$0xf]
    %v35 = vld [vmem:[%s1 + $0x8] sm:$0xf]
    %v36 = vld [vmem:[%s1 + $0xc] sm:$0xf]
    %v37 = vld [vmem:[%s1 + $0x10] sm:$0xf]
    %v38 = vld [vmem:[%s1 + $0x14] sm:$0xf]
    %v43 = vunpack.c.l.b16 %v29
    %v44 = vunpack.c.l.b16 %v30
    %v45 = vunpack.c.l.b16 %v31
    %v46 = vunpack.c.l.b16 %v32
    %v47 = vpack.c.b16 %v44, %v43
    %v48 = vpack.c.b16 %v46, %v45
    %v55 = vunpack.c.l.b16 %v33
    %v56 = vunpack.c.l.b16 %v34
    %v57 = vunpack.c.l.b16 %v35
    %v58 = vunpack.c.l.b16 %v36
    %v59 = vunpack.c.l.b16 %v37
    %v60 = vunpack.c.l.b16 %v38
    %v61 = vpack.c.b16 %v56, %v55
    %v62 = vpack.c.b16 %v58, %v57
    %v63 = vpack.c.b16 %v60, %v59
    %vm67 = vcmask 392192
    %v69 = vsel %vm67, %v47, 0
    %v72 = vsel %vm67, %v48, 0
    %74 = vmatpush.bf16.msra.mxu0 0
    %75 = vmatpush.bf16.msra.mxu0 0
    %76 = vmatpush.bf16.msra.mxu0 0
    %77 = vmatpush.bf16.msra.mxu0 0
    %78 = vmatpush.bf16.msra.mxu0 0
    %79 = vmatpush.bf16.msra.mxu0 %v63
    %80 = vmatpush.bf16.msra.mxu0 %v62
    %81 = vmatpush.bf16.msra.mxu0 %v61
    %82 = vmatmul.bf16.gmra.mxu0 %v69
    %v83 = vpop.f32.mrf.mxu0
    %v84 = vadd.f32 0.0, %v83
    %v85 = vpop.f32.mrf.mxu0
    %v86 = vadd.f32 0.0, %v85
    %87 = vmatmul.bf16.gmra.mxu0 %v72
    %v88 = vpop.f32.mrf.mxu0
    %v89 = vadd.f32 0.0, %v88
    %v90 = vpop.f32.mrf.mxu0
    %v91 = vadd.f32 0.0, %v90
    %92 = vdwg.mxu0
    %v93 = vadd.f32 %v25, %v84
    %v94 = vadd.f32 %v26, %v86
    %v95 = vadd.f32 %v27, %v89
    %v96 = vadd.f32 %v28, %v91
    %vm97 = vcmask 261120
    %98 = vst.msk [vmem:[#allocation2] sm:$0xff] %vm97, %v93
    %99 = vst.msk [vmem:[#allocation2 + $0x8] sm:$0xff] %vm97, %v94
    %100 = vst.msk [vmem:[#allocation2 + $0x10] sm:$0xff] %vm97, %v95
    %101 = vst.msk [vmem:[#allocation2 + $0x18] sm:$0xff] %vm97, %v96
    // Predicated region
    $region18: #{tpu_custom_call.1} parent=1 // pred_check
      %p102 = pneg %p16
    $region19: #{tpu_custom_call.1} parent=1 // pred_check_branch
      %104 = sbr.rel (%p102) target = $region21
    $region20: #{tpu_custom_call.1} parent=1 // pred_region
      %v105 = vld [vmem:[#allocation2] sm:$0xff]
      %v106 = vld [vmem:[#allocation2 + $0x8] sm:$0xff]
      %v107 = vld [vmem:[#allocation2 + $0x10] sm:$0xff]
      %v108 = vld [vmem:[#allocation2 + $0x18] sm:$0xff]
      %v109 = vld [vmem:[%s2] sm:$0x1]
      %v111 = vperm.slane %v109, 0
      %v113 = vadd.f32 %v105, %v111
      %v114 = vadd.f32 %v106, %v111
      %v115 = vadd.f32 %v107, %v111
      %v116 = vadd.f32 %v108, %v111
      %v117 = vpack.c.bf16 %v113, %v113
      %v118 = vpack.c.bf16 %v114, %v114
      %v119 = vpack.c.bf16 %v115, %v115
      %v120 = vpack.c.bf16 %v116, %v116
      %vm121 = vcmask 257024
      %122 = vst.msk [vmem:[#allocation3] sm:$0xf] %vm121, %v117
      %123 = vst.msk [vmem:[#allocation3 + $0x4] sm:$0xf] %vm121, %v118
      %124 = vst.msk [vmem:[#allocation3 + $0x8] sm:$0xf] %vm121, %v119
      %125 = vst.msk [vmem:[#allocation3 + $0xc] sm:$0xf] %vm121, %v120
    $region21: #{tpu_custom_call.1} parent=1 // pred_fallthru
      _
    // Predicated region
    $region22: #{tpu_custom_call.1} parent=1 // pred_check
      _
    $region23: #{tpu_custom_call.1} parent=1 // pred_check_branch
      %127 = sbr.rel (0) target = $region25
    $region24: #{tpu_custom_call.1} parent=1 // pred_region
      %129 = vsyncadd [#allocation4], 0
      %s130 = sshll.u32 [#allocation3], 4
      %s131 = int_to_ptr.vmem [resolvable:$true] %s130
      %s132 = sshll.u32 %s3, 4
      %s133 = int_to_ptr.hbm [resolvable:$true] %s132
      %138 = dma.vmem_to_hbm [thread:$0]  %s131, 256, %s133, [#allocation4], 64, 64, 4
    $region25: #{tpu_custom_call.1} parent=1 // pred_fallthru
      _
    // Predicated region
    $region26: #{tpu_custom_call.1} parent=1 // pred_check
      _
    $region27: #{tpu_custom_call.1} parent=1 // pred_check_branch
      %140 = sbr.rel (0) target = $region29
    $region28: #{tpu_custom_call.1} parent=1 // pred_region
      %142 = dma.done [#allocation4], 256
    $region29: #{tpu_custom_call.1} parent=1 // pred_fallthru
      _
    %143 = vsyncpa [#allocation4], 1

</llo_original>
